<compile_context>
chip_gen: v7x
topology: tpu7x:2x2x1
jax: 0.10.0
libtpu: 0.0.40
codegen_flags: <defaults>
</compile_context>

<pallas_src>
import jax
import jax.numpy as jnp
from jax import lax
from jax.experimental import pallas as pl
from jax.experimental.pallas import tpu as pltpu

TEMPERATURE = 0.07
_NORM_EPS = 1e-12  # matches torch.nn.functional.normalize default eps


def _round_up(x, m):
    return (x + m - 1) // m * m


def _make_kernel(true_b, guard_pad_rows, guard_pad_cols):
    """Per-row-tile kernel. `true_b` = un-padded batch size (static)."""
    inv_temp = 1.0 / TEMPERATURE
    eps_sq = _NORM_EPS * _NORM_EPS

    def kernel(t_ref, a_ref, lab_col_ref, lab_row_ref, row_sum_ref, row_cnt_ref):
        tq = t_ref.shape[0]
        bl = a_ref.shape[1]

        # --- text tile: fused L2-normalize + 1/temperature fold (EUP rsqrt) ---
        t = t_ref[...]                                           # (Tq, D) f32
        ssq = jnp.sum(t * t, axis=-1, keepdims=True)             # (Tq, 1)
        scale = inv_temp * lax.rsqrt(jnp.maximum(ssq, eps_sq))   # == inv_temp / max(||t||, eps)
        t_bf = (t * scale).astype(jnp.bfloat16)                  # (Tq, D) bf16

        # --- similarity on the MXU: (Tq, D) x (D, Bl), bf16 in, f32 acc ---
        # Audio operand already carries 1/||a_j|| (folded in the wrapper).
        logits = lax.dot_general(
            t_bf, a_ref[...], (((1,), (0,)), ((), ())),
            preferred_element_type=jnp.float32)                  # (Tq, Bl)

        row0 = pl.program_id(0) * tq
        gr = row0 + lax.broadcasted_iota(jnp.int32, (tq, 1), 0)  # global row id
        gc = lax.broadcasted_iota(jnp.int32, (1, bl), 1)         # column id

        if guard_pad_cols:
            # Padded audio columns must not contribute to logZ.
            logits = jnp.where(gc < true_b, logits, jnp.float32(-1e30))

        # --- row-wise log-softmax pieces (no (Tq,B) log_probs materialized) ---
        row_max = jnp.max(logits, axis=-1, keepdims=True)
        shifted = logits - row_max
        logz = jnp.log(jnp.sum(jnp.exp(shifted), axis=-1, keepdims=True))  # (Tq, 1)

        # --- positive-pair mask: same label & off-diagonal (& not padded) ---
        valid = jnp.logical_and(lab_col_ref[...] == lab_row_ref[...], gr != gc)
        if guard_pad_rows:
            valid = jnp.logical_and(valid, gr < true_b)
        if guard_pad_cols:
            valid = jnp.logical_and(valid, gc < true_b)

        # --- per-row partial reductions (select instead of mask-multiply) ---
        rowcount = jnp.sum(valid.astype(jnp.float32), axis=-1, keepdims=True)
        masked_sum = jnp.sum(jnp.where(valid, shifted, 0.0), axis=-1, keepdims=True)
        row_sum_ref[...] = masked_sum - rowcount * logz
        row_cnt_ref[...] = rowcount

    return kernel


def _vmem_budget_bytes():
    """Scoped VMEM budget with headroom, per TPU generation."""
    try:
        cap = int(pltpu.get_tpu_info().vmem_capacity_bytes)
    except Exception:
        cap = 64 << 20  # assume the smallest (v7x-sized) part if the query fails
    # Leave ~25% headroom for Mosaic internal scratch / semaphores / outputs:
    # ~48 MiB on a 64 MiB part (v7x), ~96 MiB on 128 MiB parts (v5e/v6e).
    return max(16 << 20, int(cap * 0.75)), cap


def contrastive_loss(text_emb, audio_emb, labels, *, tile_rows=256):
    """Equivalent of ContrastiveLoss(temperature=0.07).forward(text, audio, labels)."""
    B, D = text_emb.shape
    text_emb = text_emb.astype(jnp.float32)
    audio_emb = audio_emb.astype(jnp.float32)
    labels = labels.astype(jnp.int32)

    budget, cap = _vmem_budget_bytes()

    # Lane-pad the audio/column axis to a multiple of 128 (MXU / lane alignment);
    # padded columns are masked out of the softmax inside the kernel.
    Bl = _round_up(B, 128)
    guard_pad_cols = Bl != B

    # Row tile: multiple of 8 sublanes.
    tq = max(8, _round_up(tile_rows, 8))
    if B >= 16:
        # Guarantee grid >= 2 so both v7x TensorCores get work under "parallel".
        tq = min(tq, _round_up((B + 1) // 2, 8))
    tq = min(tq, _round_up(B, 8))
    if cap <= (64 << 20) and (D * Bl * 2 >= (16 << 20) or B >= 8192):
        tq = min(tq, 128)  # v7x: smaller row tiles under VMEM pressure

    def est_vmem(t):
        return (D * Bl * 2 + Bl * 4              # resident audio^T bf16 + label row (single-buffered)
                + 2 * t * (D + 1) * 4            # text tile + label column (double-buffered)
                + 6 * t * max(Bl, 128) * 4       # (Tq, B) elementwise temporaries
                + 4 * t * 4                      # output tiles
                + (2 << 20))
    while tq > 8 and est_vmem(tq) > budget:
        tq = max(8, _round_up(tq // 2, 8))

    bp = _round_up(B, tq)
    grid = bp // tq
    guard_pad_rows = bp != B

    # Pad text rows + their labels to the tile boundary (masked out in-kernel).
    if guard_pad_rows:
        text_p = jnp.pad(text_emb, ((0, bp - B), (0, 0)))
        lab_col = jnp.pad(labels, (0, bp - B)).reshape(bp, 1)
    else:
        text_p = text_emb
        lab_col = labels.reshape(B, 1)

    # Wrapper-side layout/dtype plumbing for the resident audio operand:
    # fold 1/||a_j|| into the rows, pad columns to Bl, transpose to (D, Bl), bf16.
    inv_a = lax.rsqrt(jnp.maximum(
        jnp.sum(audio_emb * audio_emb, axis=-1, keepdims=True), _NORM_EPS * _NORM_EPS))
    a_n = audio_emb * inv_a                                       # (B, D) unit rows, f32
    if guard_pad_cols:
        a_n = jnp.pad(a_n, ((0, Bl - B), (0, 0)))
        lab_row = jnp.pad(labels, (0, Bl - B)).reshape(1, Bl)
    else:
        lab_row = labels.reshape(1, B)
    a_t = a_n.T.astype(jnp.bfloat16)                              # (D, Bl)

    vmem_limit = int(min(max(est_vmem(tq), 16 << 20), budget))
    kernel = _make_kernel(B, guard_pad_rows, guard_pad_cols)
    out_shape = (jax.ShapeDtypeStruct((bp, 1), jnp.float32),
                 jax.ShapeDtypeStruct((bp, 1), jnp.float32))
    out_specs = (pl.BlockSpec((tq, 1), lambda i: (i, 0)),
                 pl.BlockSpec((tq, 1), lambda i: (i, 0)))
    compiler_params = pltpu.CompilerParams(
        dimension_semantics=("parallel",),
        vmem_limit_bytes=vmem_limit)
    cost = pl.CostEstimate(
        flops=2 * bp * Bl * D,
        transcendentals=bp * Bl + 2 * bp,
        bytes_accessed=bp * D * 4 + D * Bl * 2 + (bp + Bl) * 4 + 2 * bp * 4)

    def run(single_buffer_resident):
        # Grid-invariant inputs are single-buffered (their block never changes,
        # so double buffering only wastes VMEM — e.g. D*B*2 bytes for audio^T).
        res = ({"pipeline_mode": pl.Buffered(1)}
               if single_buffer_resident and hasattr(pl, "Buffered") else {})
        in_specs = [
            pl.BlockSpec((tq, D), lambda i: (i, 0)),            # text rows: tiled
            pl.BlockSpec((D, Bl), lambda i: (0, 0), **res),     # normalized audio^T: resident
            pl.BlockSpec((tq, 1), lambda i: (i, 0)),            # labels (column view): tiled
            pl.BlockSpec((1, Bl), lambda i: (0, 0), **res),     # labels (row view): resident
        ]
        return pl.pallas_call(
            kernel,
            grid=(grid,),
            out_shape=out_shape,
            in_specs=in_specs,
            out_specs=out_specs,
            compiler_params=compiler_params,
            cost_estimate=cost,
        )(text_p, a_t, lab_col, lab_row)

    try:
        row_sums, row_cnts = run(True)
    except Exception:
        # Fallback for JAX builds where pipeline_mode=pl.Buffered(1) is unsupported.
        row_sums, row_cnts = run(False)

    masked_sum = jnp.sum(row_sums)
    count = jnp.sum(row_cnts)
    # TODO(synk): PyTorch prints a host-side warning when no positive pairs exist;
    # here we just return 0.0 in that case (same numerical result, no print).
    loss = jnp.where(count > 0, -masked_sum / jnp.maximum(count, 1.0), 0.0)
    return loss


def _reference_loss(text_emb, audio_emb, labels):
    t = text_emb / jnp.maximum(
        jnp.linalg.norm(text_emb, axis=-1, keepdims=True), _NORM_EPS)
    a = audio_emb / jnp.maximum(
        jnp.linalg.norm(audio_emb, axis=-1, keepdims=True), _NORM_EPS)
    logits = (t @ a.T) / TEMPERATURE
    lab = labels.reshape(-1, 1)
    mask = (lab == lab.T).astype(jnp.float32)
    mask = mask * (1.0 - jnp.eye(mask.shape[0], dtype=jnp.float32))
    log_probs = jax.nn.log_softmax(logits, axis=1)
    count = jnp.sum(mask)
    return jnp.where(count > 0,
                     -jnp.sum(log_probs * mask) / jnp.maximum(count, 1.0), 0.0)


if __name__ == "__main__":
    key = jax.random.PRNGKey(0)
    k1, k2, k3, k4 = jax.random.split(key, 4)

    # Case 1: small single-tile path (grid=(1,), padded columns).
    B, D = 8, 32
    text_emb = jax.random.normal(k1, (B, D), dtype=jnp.float32)
    audio_emb = jax.random.normal(k2, (B, D), dtype=jnp.float32)
    labels = jnp.array([0, 1, 0, 2, 1, 3, 2, 0], dtype=jnp.int32)
    loss = contrastive_loss(text_emb, audio_emb, labels)
    jax.block_until_ready(loss)
    ref = _reference_loss(text_emb, audio_emb, labels)
    # bf16 MXU matmul -> slightly looser tolerance vs. the f32 reference.
    assert jnp.allclose(loss, ref, rtol=5e-2, atol=5e-2), (loss, ref)

    # Case 2: exercises the row-tiled parallel grid (grid=(3,)) + padded rows/cols.
    B2, D2 = 20, 48
    text2 = jax.random.normal(k3, (B2, D2), dtype=jnp.float32)
    audio2 = jax.random.normal(k4, (B2, D2), dtype=jnp.float32)
    labels2 = jnp.arange(B2, dtype=jnp.int32) % 5
    loss2 = contrastive_loss(text2, audio2, labels2, tile_rows=8)
    jax.block_until_ready(loss2)
    ref2 = _reference_loss(text2, audio2, labels2)
    assert jnp.allclose(loss2, ref2, rtol=5e-2, atol=5e-2), (loss2, ref2)

    print("KERNEL_OK")
</pallas_src>

<mosaic_0001>
module attributes {stable_mosaic.version = 11 : i64} {
  func.func @kernel(%arg0: i32, %arg1: memref<8x32xf32, #tpu.memory_space<vmem>>, %arg2: memref<32x128xbf16, #tpu.memory_space<vmem>>, %arg3: memref<8x1xi32, #tpu.memory_space<vmem>>, %arg4: memref<1x128xi32, #tpu.memory_space<vmem>>, %arg5: memref<8x1xf32, #tpu.memory_space<vmem>>, %arg6: memref<8x1xf32, #tpu.memory_space<vmem>>) attributes {dimension_semantics = [#tpu.dimension_semantics<parallel>], iteration_bounds = array<i64: 1>, scalar_prefetch = 0 : i64, scratch_operands = 0 : i64, tpu.core_type = #tpu.core_type<tc>, window_params = [{transform_indices = @transform_0, window_bounds = array<i64: 8, 32>}, {pipeline_mode = #tpu.pipeline_mode<synchronous>, transform_indices = @transform_1, window_bounds = array<i64: 32, 128>}, {transform_indices = @transform_2, window_bounds = array<i64: 8, 1>}, {pipeline_mode = #tpu.pipeline_mode<synchronous>, transform_indices = @transform_3, window_bounds = array<i64: 1, 128>}, {transform_indices = @transform_4, window_bounds = array<i64: 8, 1>}, {transform_indices = @transform_5, window_bounds = array<i64: 8, 1>}]} {
    %c0 = arith.constant 0 : index
    %c0_0 = arith.constant 0 : index
    %0 = vector.load %arg1[%c0, %c0_0] : memref<8x32xf32, #tpu.memory_space<vmem>>, vector<8x32xf32>
    %1 = arith.mulf %0, %0 : vector<8x32xf32>
    %cst = arith.constant dense<0.000000e+00> : vector<8xf32>
    %2 = vector.multi_reduction <add>, %1, %cst [1] : vector<8x32xf32> to vector<8xf32>
    %3 = vector.shape_cast %2 : vector<8xf32> to vector<8x1xf32>
    %cst_1 = arith.constant 1.000000e-24 : f32
    %4 = vector.broadcast %cst_1 : f32 to vector<8x1xf32>
    %5 = arith.maximumf %3, %4 : vector<8x1xf32>
    %6 = math.rsqrt %5 : vector<8x1xf32>
    %cst_2 = arith.constant 14.2857141 : f32
    %7 = vector.broadcast %cst_2 : f32 to vector<8x1xf32>
    %8 = arith.mulf %7, %6 : vector<8x1xf32>
    %9 = vector.broadcast %8 : vector<8x1xf32> to vector<8x32xf32>
    %10 = arith.mulf %0, %9 : vector<8x32xf32>
    %11 = arith.truncf %10 : vector<8x32xf32> to vector<8x32xbf16>
    %c0_3 = arith.constant 0 : index
    %c0_4 = arith.constant 0 : index
    %12 = vector.load %arg2[%c0_3, %c0_4] : memref<32x128xbf16, #tpu.memory_space<vmem>>, vector<32x128xbf16>
    %cst_5 = arith.constant dense<0.000000e+00> : vector<8x128xf32>
    %13 = tpu.matmul %11, %12, %cst_5 {dimension_numbers = #tpu.dot_dimension_numbers<[1], [0], [0], [1], [0, 0, 1, 1], [], []>} : vector<8x32xbf16>, vector<32x128xbf16>, vector<8x128xf32> -> vector<8x128xf32>
    %c8_i32 = arith.constant 8 : i32
    %14 = arith.muli %arg0, %c8_i32 : i32
    %15 = tpu.iota {dimensions = array<i32: 0>} : vector<8x1xi32>
    %16 = vector.broadcast %14 : i32 to vector<8x1xi32>
    %17 = arith.addi %16, %15 : vector<8x1xi32>
    %18 = tpu.iota {dimensions = array<i32: 1>} : vector<1x128xi32>
    %c8_i32_6 = arith.constant 8 : i32
    %19 = vector.broadcast %c8_i32_6 : i32 to vector<1x128xi32>
    %20 = arith.cmpi slt, %18, %19 : vector<1x128xi32>
    %cst_7 = arith.constant -1.000000e+30 : f32
    %21 = vector.shape_cast %20 : vector<1x128xi1> to vector<1x128xi1>
    %22 = vector.broadcast %21 : vector<1x128xi1> to vector<8x128xi1>
    %23 = vector.broadcast %cst_7 : f32 to vector<8x128xf32>
    %24 = arith.select %22, %13, %23 : vector<8x128xi1>, vector<8x128xf32>
    %cst_8 = arith.constant dense<0xFF800000> : vector<8xf32>
    %25 = vector.multi_reduction <maximumf>, %24, %cst_8 [1] : vector<8x128xf32> to vector<8xf32>
    %26 = vector.shape_cast %25 : vector<8xf32> to vector<8x1xf32>
    %27 = vector.broadcast %26 : vector<8x1xf32> to vector<8x128xf32>
    %28 = arith.subf %24, %27 : vector<8x128xf32>
    %29 = math.exp %28 : vector<8x128xf32>
    %cst_9 = arith.constant dense<0.000000e+00> : vector<8xf32>
    %30 = vector.multi_reduction <add>, %29, %cst_9 [1] : vector<8x128xf32> to vector<8xf32>
    %31 = vector.shape_cast %30 : vector<8xf32> to vector<8x1xf32>
    %32 = math.log %31 : vector<8x1xf32>
    %c0_10 = arith.constant 0 : index
    %c0_11 = arith.constant 0 : index
    %33 = vector.load %arg3[%c0_10, %c0_11] : memref<8x1xi32, #tpu.memory_space<vmem>>, vector<8x1xi32>
    %c0_12 = arith.constant 0 : index
    %c0_13 = arith.constant 0 : index
    %34 = vector.load %arg4[%c0_12, %c0_13] : memref<1x128xi32, #tpu.memory_space<vmem>>, vector<1x128xi32>
    %35 = vector.broadcast %33 : vector<8x1xi32> to vector<8x128xi32>
    %36 = vector.broadcast %34 : vector<1x128xi32> to vector<8x128xi32>
    %37 = arith.cmpi eq, %35, %36 : vector<8x128xi32>
    %38 = vector.broadcast %17 : vector<8x1xi32> to vector<8x128xi32>
    %39 = vector.broadcast %18 : vector<1x128xi32> to vector<8x128xi32>
    %40 = arith.cmpi ne, %38, %39 : vector<8x128xi32>
    %41 = arith.andi %37, %40 : vector<8x128xi1>
    %c8_i32_14 = arith.constant 8 : i32
    %42 = vector.broadcast %c8_i32_14 : i32 to vector<1x128xi32>
    %43 = arith.cmpi slt, %18, %42 : vector<1x128xi32>
    %44 = vector.broadcast %43 : vector<1x128xi1> to vector<8x128xi1>
    %45 = arith.andi %41, %44 : vector<8x128xi1>
    %46 = arith.extui %45 : vector<8x128xi1> to vector<8x128xi32>
    %47 = arith.sitofp %46 : vector<8x128xi32> to vector<8x128xf32>
    %cst_15 = arith.constant dense<0.000000e+00> : vector<8xf32>
    %48 = vector.multi_reduction <add>, %47, %cst_15 [1] : vector<8x128xf32> to vector<8xf32>
    %49 = vector.shape_cast %48 : vector<8xf32> to vector<8x1xf32>
    %cst_16 = arith.constant 0.000000e+00 : f32
    %50 = vector.broadcast %cst_16 : f32 to vector<8x128xf32>
    %51 = arith.select %45, %28, %50 : vector<8x128xi1>, vector<8x128xf32>
    %cst_17 = arith.constant dense<0.000000e+00> : vector<8xf32>
    %52 = vector.multi_reduction <add>, %51, %cst_17 [1] : vector<8x128xf32> to vector<8xf32>
    %53 = vector.shape_cast %52 : vector<8xf32> to vector<8x1xf32>
    %54 = arith.mulf %49, %32 : vector<8x1xf32>
    %55 = arith.subf %53, %54 : vector<8x1xf32>
    %c0_18 = arith.constant 0 : index
    %c0_19 = arith.constant 0 : index
    %56 = vector.load %arg5[%c0_18, %c0_19] : memref<8x1xf32, #tpu.memory_space<vmem>>, vector<8x1xf32>
    tpu.vector_store %arg5[%c0_18, %c0_19], %55 {strides = array<i32>} : memref<8x1xf32, #tpu.memory_space<vmem>>, vector<8x1xf32>,
    %c0_20 = arith.constant 0 : index
    %c0_21 = arith.constant 0 : index
    %57 = vector.load %arg6[%c0_20, %c0_21] : memref<8x1xf32, #tpu.memory_space<vmem>>, vector<8x1xf32>
    tpu.vector_store %arg6[%c0_20, %c0_21], %49 {strides = array<i32>} : memref<8x1xf32, #tpu.memory_space<vmem>>, vector<8x1xf32>,
    return
  }
  func.func @transform_0(%arg0: i32) -> (i32, i32) {
    %c0_i32 = arith.constant 0 : i32
    %c0_i32_0 = arith.constant 0 : i32
    return %arg0, %c0_i32 : i32, i32
  }
  func.func @transform_1(%arg0: i32) -> (i32, i32) {
    %c0_i32 = arith.constant 0 : i32
    %c0_i32_0 = arith.constant 0 : i32
    %c0_i32_1 = arith.constant 0 : i32
    return %c0_i32, %c0_i32_0 : i32, i32
  }
  func.func @transform_2(%arg0: i32) -> (i32, i32) {
    %c0_i32 = arith.constant 0 : i32
    %c0_i32_0 = arith.constant 0 : i32
    return %arg0, %c0_i32 : i32, i32
  }
  func.func @transform_3(%arg0: i32) -> (i32, i32) {
    %c0_i32 = arith.constant 0 : i32
    %c0_i32_0 = arith.constant 0 : i32
    %c0_i32_1 = arith.constant 0 : i32
    return %c0_i32, %c0_i32_0 : i32, i32
  }
  func.func @transform_4(%arg0: i32) -> (i32, i32) {
    %c0_i32 = arith.constant 0 : i32
    %c0_i32_0 = arith.constant 0 : i32
    return %arg0, %c0_i32 : i32, i32
  }
  func.func @transform_5(%arg0: i32) -> (i32, i32) {
    %c0_i32 = arith.constant 0 : i32
    %c0_i32_0 = arith.constant 0 : i32
    return %arg0, %c0_i32 : i32, i32
  }
}

module attributes {stable_mosaic.version = 11 : i64} {
  func.func @kernel(%arg0: i32, %arg1: memref<8x32xf32, #tpu.memory_space<vmem>>, %arg2: memref<32x128xbf16, #tpu.memory_space<vmem>>, %arg3: memref<8x1xi32, #tpu.memory_space<vmem>>, %arg4: memref<1x128xi32, #tpu.memory_space<vmem>>, %arg5: memref<8x1xf32, #tpu.memory_space<vmem>>, %arg6: memref<8x1xf32, #tpu.memory_space<vmem>>) attributes {dimension_semantics = [#tpu.dimension_semantics<parallel>], iteration_bounds = array<i64: 1>, scalar_prefetch = 0 : i64, scratch_operands = 0 : i64, tpu.core_type = #tpu.core_type<tc>, window_params = [{transform_indices = @transform_0, window_bounds = array<i64: 8, 32>}, {pipeline_mode = #tpu.pipeline_mode<synchronous>, transform_indices = @transform_1, window_bounds = array<i64: 32, 128>}, {transform_indices = @transform_2, window_bounds = array<i64: 8, 1>}, {pipeline_mode = #tpu.pipeline_mode<synchronous>, transform_indices = @transform_3, window_bounds = array<i64: 1, 128>}, {transform_indices = @transform_4, window_bounds = array<i64: 8, 1>}, {transform_indices = @transform_5, window_bounds = array<i64: 8, 1>}]} {
    %c0 = arith.constant 0 : index
    %c0_0 = arith.constant 0 : index
    %0 = vector.load %arg1[%c0, %c0_0] : memref<8x32xf32, #tpu.memory_space<vmem>>, vector<8x32xf32>
    %1 = arith.mulf %0, %0 : vector<8x32xf32>
    %cst = arith.constant dense<0.000000e+00> : vector<8xf32>
    %2 = vector.multi_reduction <add>, %1, %cst [1] : vector<8x32xf32> to vector<8xf32>
    %3 = vector.shape_cast %2 : vector<8xf32> to vector<8x1xf32>
    %cst_1 = arith.constant 1.000000e-24 : f32
    %4 = vector.broadcast %cst_1 : f32 to vector<8x1xf32>
    %5 = arith.maximumf %3, %4 : vector<8x1xf32>
    %6 = math.rsqrt %5 : vector<8x1xf32>
    %cst_2 = arith.constant 14.2857141 : f32
    %7 = vector.broadcast %cst_2 : f32 to vector<8x1xf32>
    %8 = arith.mulf %7, %6 : vector<8x1xf32>
    %9 = vector.broadcast %8 : vector<8x1xf32> to vector<8x32xf32>
    %10 = arith.mulf %0, %9 : vector<8x32xf32>
    %11 = arith.truncf %10 : vector<8x32xf32> to vector<8x32xbf16>
    %c0_3 = arith.constant 0 : index
    %c0_4 = arith.constant 0 : index
    %12 = vector.load %arg2[%c0_3, %c0_4] : memref<32x128xbf16, #tpu.memory_space<vmem>>, vector<32x128xbf16>
    %cst_5 = arith.constant dense<0.000000e+00> : vector<8x128xf32>
    %13 = tpu.matmul %11, %12, %cst_5 {dimension_numbers = #tpu.dot_dimension_numbers<[1], [0], [0], [1], [0, 0, 1, 1], [], []>} : vector<8x32xbf16>, vector<32x128xbf16>, vector<8x128xf32> -> vector<8x128xf32>
    %c8_i32 = arith.constant 8 : i32
    %14 = arith.muli %arg0, %c8_i32 : i32
    %15 = tpu.iota {dimensions = array<i32: 0>} : vector<8x1xi32>
    %16 = vector.broadcast %14 : i32 to vector<8x1xi32>
    %17 = arith.addi %16, %15 : vector<8x1xi32>
    %18 = tpu.iota {dimensions = array<i32: 1>} : vector<1x128xi32>
    %c8_i32_6 = arith.constant 8 : i32
    %19 = vector.broadcast %c8_i32_6 : i32 to vector<1x128xi32>
    %20 = arith.cmpi slt, %18, %19 : vector<1x128xi32>
    %cst_7 = arith.constant -1.000000e+30 : f32
    %21 = vector.shape_cast %20 : vector<1x128xi1> to vector<1x128xi1>
    %22 = vector.broadcast %21 : vector<1x128xi1> to vector<8x128xi1>
    %23 = vector.broadcast %cst_7 : f32 to vector<8x128xf32>
    %24 = arith.select %22, %13, %23 : vector<8x128xi1>, vector<8x128xf32>
    %cst_8 = arith.constant dense<0xFF800000> : vector<8xf32>
    %25 = vector.multi_reduction <maximumf>, %24, %cst_8 [1] : vector<8x128xf32> to vector<8xf32>
    %26 = vector.shape_cast %25 : vector<8xf32> to vector<8x1xf32>
    %27 = vector.broadcast %26 : vector<8x1xf32> to vector<8x128xf32>
    %28 = arith.subf %24, %27 : vector<8x128xf32>
    %29 = math.exp %28 : vector<8x128xf32>
    %cst_9 = arith.constant dense<0.000000e+00> : vector<8xf32>
    %30 = vector.multi_reduction <add>, %29, %cst_9 [1] : vector<8x128xf32> to vector<8xf32>
    %31 = vector.shape_cast %30 : vector<8xf32> to vector<8x1xf32>
    %32 = math.log %31 : vector<8x1xf32>
    %c0_10 = arith.constant 0 : index
    %c0_11 = arith.constant 0 : index
    %33 = vector.load %arg3[%c0_10, %c0_11] : memref<8x1xi32, #tpu.memory_space<vmem>>, vector<8x1xi32>
    %c0_12 = arith.constant 0 : index
    %c0_13 = arith.constant 0 : index
    %34 = vector.load %arg4[%c0_12, %c0_13] : memref<1x128xi32, #tpu.memory_space<vmem>>, vector<1x128xi32>
    %35 = vector.broadcast %33 : vector<8x1xi32> to vector<8x128xi32>
    %36 = vector.broadcast %34 : vector<1x128xi32> to vector<8x128xi32>
    %37 = arith.cmpi eq, %35, %36 : vector<8x128xi32>
    %38 = vector.broadcast %17 : vector<8x1xi32> to vector<8x128xi32>
    %39 = vector.broadcast %18 : vector<1x128xi32> to vector<8x128xi32>
    %40 = arith.cmpi ne, %38, %39 : vector<8x128xi32>
    %41 = arith.andi %37, %40 : vector<8x128xi1>
    %c8_i32_14 = arith.constant 8 : i32
    %42 = vector.broadcast %c8_i32_14 : i32 to vector<1x128xi32>
    %43 = arith.cmpi slt, %18, %42 : vector<1x128xi32>
    %44 = vector.broadcast %43 : vector<1x128xi1> to vector<8x128xi1>
    %45 = arith.andi %41, %44 : vector<8x128xi1>
    %46 = arith.extui %45 : vector<8x128xi1> to vector<8x128xi32>
    %47 = arith.sitofp %46 : vector<8x128xi32> to vector<8x128xf32>
    %cst_15 = arith.constant dense<0.000000e+00> : vector<8xf32>
    %48 = vector.multi_reduction <add>, %47, %cst_15 [1] : vector<8x128xf32> to vector<8xf32>
    %49 = vector.shape_cast %48 : vector<8xf32> to vector<8x1xf32>
    %cst_16 = arith.constant 0.000000e+00 : f32
    %50 = vector.broadcast %cst_16 : f32 to vector<8x128xf32>
    %51 = arith.select %45, %28, %50 : vector<8x128xi1>, vector<8x128xf32>
    %cst_17 = arith.constant dense<0.000000e+00> : vector<8xf32>
    %52 = vector.multi_reduction <add>, %51, %cst_17 [1] : vector<8x128xf32> to vector<8xf32>
    %53 = vector.shape_cast %52 : vector<8xf32> to vector<8x1xf32>
    %54 = arith.mulf %49, %32 : vector<8x1xf32>
    %55 = arith.subf %53, %54 : vector<8x1xf32>
    %c0_18 = arith.constant 0 : index
    %c0_19 = arith.constant 0 : index
    %56 = vector.load %arg5[%c0_18, %c0_19] : memref<8x1xf32, #tpu.memory_space<vmem>>, vector<8x1xf32>
    tpu.vector_store %arg5[%c0_18, %c0_19], %55 {strides = array<i32>} : memref<8x1xf32, #tpu.memory_space<vmem>>, vector<8x1xf32>,
    %c0_20 = arith.constant 0 : index
    %c0_21 = arith.constant 0 : index
    %57 = vector.load %arg6[%c0_20, %c0_21] : memref<8x1xf32, #tpu.memory_space<vmem>>, vector<8x1xf32>
    tpu.vector_store %arg6[%c0_20, %c0_21], %49 {strides = array<i32>} : memref<8x1xf32, #tpu.memory_space<vmem>>, vector<8x1xf32>,
    return
  }
  func.func @transform_0(%arg0: i32) -> (i32, i32) {
    %c0_i32 = arith.constant 0 : i32
    %c0_i32_0 = arith.constant 0 : i32
    return %arg0, %c0_i32 : i32, i32
  }
  func.func @transform_1(%arg0: i32) -> (i32, i32) {
    %c0_i32 = arith.constant 0 : i32
    %c0_i32_0 = arith.constant 0 : i32
    %c0_i32_1 = arith.constant 0 : i32
    return %c0_i32, %c0_i32_0 : i32, i32
  }
  func.func @transform_2(%arg0: i32) -> (i32, i32) {
    %c0_i32 = arith.constant 0 : i32
    %c0_i32_0 = arith.constant 0 : i32
    return %arg0, %c0_i32 : i32, i32
  }
  func.func @transform_3(%arg0: i32) -> (i32, i32) {
    %c0_i32 = arith.constant 0 : i32
    %c0_i32_0 = arith.constant 0 : i32
    %c0_i32_1 = arith.constant 0 : i32
    return %c0_i32, %c0_i32_0 : i32, i32
  }
  func.func @transform_4(%arg0: i32) -> (i32, i32) {
    %c0_i32 = arith.constant 0 : i32
    %c0_i32_0 = arith.constant 0 : i32
    return %arg0, %c0_i32 : i32, i32
  }
  func.func @transform_5(%arg0: i32) -> (i32, i32) {
    %c0_i32 = arith.constant 0 : i32
    %c0_i32_0 = arith.constant 0 : i32
    return %arg0, %c0_i32 : i32, i32
  }
}

</mosaic_0001>

<llo_original>
// kernel: tpu_custom_call.1
$region0: #{tpu_custom_call.1}
  #allocation0 [shape = 'u32[]', space=smem, size = 0x4, offset = 0x4, fixed_abs, tag = 'smem constant byte address 0x4 - core index']
  #allocation1 [shape = 'u32[144,128]{1,0:T(1,128)}', space=vmem, size = 0x12000, scoped, tag = 'internal scratch']
  %s0 = inlined_call_operand.vmem [shape: f32[8,32], index: 0, kind: input, shape index: {}]
  %s1 = inlined_call_operand.hbm [shape: bf16[32,128], index: 1, kind: input, shape index: {}]
  %s2 = inlined_call_operand.vmem [shape: s32[8,1], index: 2, kind: input, shape index: {}]
  %s3 = inlined_call_operand.vmem [shape: s32[1,128], index: 3, kind: input, shape index: {}]
  %s4 = inlined_call_operand.vmem [shape: f32[8,1], index: 4, kind: output, shape index: {0}]
  %s5 = inlined_call_operand.vmem [shape: f32[8,1], index: 5, kind: output, shape index: {1}]
  %6 = xla_tuple %s4, %s5
  %s7 = sld [smem:[#allocation0]]
  $region38: #{tpu_custom_call.1} parent=0
    _
  %s9 = ssub.s32 1, %s7
  %s10 = scalar_select 0, %s9, %s7
  $region1: #{tpu_custom_call.1} parent=0
    #allocation2 [shape = 'u8[8192]{0}', space=vmem, size = 0x2000, scoped, tag = 'input window, operand 1, single buffered']
    #allocation3 [shape = 's32[1]{0}', space=sflag, size = 0x4, scoped, tag = 'scoped memory for tpu_custom_call.1']
    %11 = vsyncpa [#allocation3], 0
    // Predicated region
    $region2: #{tpu_custom_call.1} parent=1 // pred_check
      _
    $region3: #{tpu_custom_call.1} parent=1 // pred_check_branch
      %13 = sbr.rel (0) target = $region5
    $region4: #{tpu_custom_call.1} parent=1 // pred_region
      _
    $region5: #{tpu_custom_call.1} parent=1 // pred_fallthru
      _
    // Predicated region
    $region6: #{tpu_custom_call.1} parent=1 // pred_check
      _
    $region7: #{tpu_custom_call.1} parent=1 // pred_check_branch
      %15 = sbr.rel (0) target = $region9
    $region8: #{tpu_custom_call.1} parent=1 // pred_region
      %s17 = ssub.s32 256, 256
      %18 = vsyncadd [#allocation3], %s17
      %s19 = sshll.u32 [#allocation2], 4
      %s20 = int_to_ptr.vmem [resolvable:$true] %s19
      %25 = dma.hbm_to_vmem [thread:$0]  %s1, 256, %s20, [#allocation3], 64, 64, 4
    $region9: #{tpu_custom_call.1} parent=1 // pred_fallthru
      _
    // Predicated region
    $region10: #{tpu_custom_call.1} parent=1 // pred_check
      _
    $region11: #{tpu_custom_call.1} parent=1 // pred_check_branch
      %27 = sbr.rel (0) target = $region13
    $region12: #{tpu_custom_call.1} parent=1 // pred_region
      _
    $region13: #{tpu_custom_call.1} parent=1 // pred_fallthru
      _
    // Predicated region
    $region14: #{tpu_custom_call.1} parent=1 // pred_check
      _
    $region15: #{tpu_custom_call.1} parent=1 // pred_check_branch
      %29 = sbr.rel (0) target = $region17
    $region16: #{tpu_custom_call.1} parent=1 // pred_region
      _
    $region17: #{tpu_custom_call.1} parent=1 // pred_fallthru
      _
    // Predicated region
    $region18: #{tpu_custom_call.1} parent=1 // pred_check
      _
    $region19: #{tpu_custom_call.1} parent=1 // pred_check_branch
      %31 = sbr.rel (0) target = $region21
    $region20: #{tpu_custom_call.1} parent=1 // pred_region
      %32 = dma.done [#allocation3], 256
    $region21: #{tpu_custom_call.1} parent=1 // pred_fallthru
      _
    %v34 = vld [vmem:[%s0] sm:$0xff]
    %v35 = vmul.f32 %v34, %v34
    %vm36 = vcmask 261120
    %v37 = vsel %vm36, %v35, 0.0
    %38 = vadd.xlane.f32.xlu0 %v37
    %v39 = vpop.xlane.xlu0 %38
    %v40 = vmax.f32 %v39, 1e-24
    %v41 = vrsqrt.pop %v40
    %v42 = vmul.f32 %v41, 14.285714
    %v43 = vmul.f32 %v34, %v42
    %v44 = vpack.c.bf16 %v43, %v43
    %v45 = vld [vmem:[#allocation2] sm:$0xf]
    %v46 = vld [vmem:[#allocation2 + $0x4] sm:$0xf]
    %v47 = vld [vmem:[#allocation2 + $0x8] sm:$0xf]
    %v48 = vld [vmem:[#allocation2 + $0xc] sm:$0xf]
    %v53 = vunpack.c.l.b16 %v45
    %v54 = vunpack.c.l.b16 %v46
    %v55 = vunpack.c.l.b16 %v47
    %v56 = vunpack.c.l.b16 %v48
    %v57 = vpack.c.b16 %v54, %v53
    %v58 = vpack.c.b16 %v56, %v55
    %v62 = vsel %vm36, %v44, 0
    %64 = vmatprep.subr.bf16.mxu0 0
    %65 = vmatpush1.bf16.msra.mxu0 %v57
    %66 = vmatprep.subr.bf16.mxu0 0
    %67 = vmatpush1.bf16.msra.mxu0 %v58
    %68 = vmatprep.subr.bf16.mxu0 0
    %69 = vmatpush1.bf16.msra.mxu0 0
    %70 = vmatprep.subr.bf16.mxu0 0
    %71 = vmatpush1.bf16.msra.mxu0 0
    %72 = vmatprep.subr.bf16.mxu0 0
    %73 = vmatpush1.bf16.msra.mxu0 0
    %74 = vmatprep.subr.bf16.mxu0 0
    %75 = vmatpush1.bf16.msra.mxu0 0
    %76 = vmatprep.subr.bf16.mxu0 0
    %77 = vmatpush1.bf16.msra.mxu0 0
    %78 = vmatprep.subr.bf16.mxu0 0
    %79 = vmatpush1.bf16.msra.mxu0 0
    %80 = vmatprep.subr.bf16.mxu0 0
    %81 = vmatpush1.bf16.msra.mxu0 0
    %82 = vmatprep.subr.bf16.mxu0 0
    %83 = vmatpush1.bf16.msra.mxu0 0
    %84 = vmatprep.subr.bf16.mxu0 0
    %85 = vmatpush1.bf16.msra.mxu0 0
    %86 = vmatprep.subr.bf16.mxu0 0
    %87 = vmatpush1.bf16.msra.mxu0 0
    %88 = vmatprep.subr.bf16.mxu0 0
    %89 = vmatpush1.bf16.msra.mxu0 0
    %90 = vmatprep.subr.bf16.mxu0 0
    %91 = vmatpush1.bf16.msra.mxu0 0
    %92 = vmatprep.subr.bf16.mxu0 0
    %93 = vmatpush1.bf16.msra.mxu0 0
    %94 = vmatprep.subr.bf16.mxu0 0
    %95 = vmatpush1.bf16.msra.mxu0 0
    %96 = vmatprep.mubr.bf16.mxu0 0
    %97 = vmatmul.mubr.bf16.gmra.mrb[0].mxu0 %v62
    %v98 = vpop.f32.mrb[0].mxu0
    %v99 = vadd.f32 0.0, %v98
    %v100 = vpop.f32.mrb[0].mxu0
    %v101 = vpop.f32.mrb[0].mxu0
    %v102 = vpop.f32.mrb[0].mxu0
    %103 = vdwg.mxu0
    %s104 = smul.u32 0, 8
    %v105 = vlaneseq
    %v106 = vshrl.u32 %v105, 7
    %v107 = vstv %s104
    %v108 = vadd.s32 %v107, %v106
    %v109 = vlaneseq
    %v110 = vand.u32 %v109, 127
    %vm111 = vcmp.lt.s32.totalorder %v110, 8
    %v112 = vsel %vm111, 1, 0
    %vm113 = vcmp.eq.s32.totalorder %v112, 1
    %v114 = vsel %vm113, %v99, -1e+30
    %115 = vmax.xlane.f32.xlu0 %v114
    %v116 = vpop.xlane.xlu0 %115
    %v117 = vsub.f32 %v114, %v116
    %v118 = vmul.f32 %v117, 1.442695
    %v119 = vpow.pop %v118
    %120 = vadd.xlane.f32.xlu0 %v119
    %v121 = vpop.xlane.xlu0 %120
    %v122 = vlog2.pop %v121
    %v123 = vmul.f32 %v122, 0.6931472
    %v124 = vld [vmem:[%s2] sm:$0xff]
    %v125 = vld [vmem:[%s3] sm:$0x1]
    %126 = vset.pattern.permute.xlu0 0
    %127 = vperm.xlu0 %126, %v124
    %v128 = vpop.permute.xlu0 %127
    %v129 = vlaneseq
    %v130 = vshrl.u32 %v129, 7
    %v131 = vsub.s32 0, %v130
    %v132 = vrot.slane %v125, %v131
    %vm133 = vcmp.eq.s32.totalorder %v128, %v132
    %vm134 = vcmp.ne.s32.totalorder %v108, %v110
    %vm135 = vmand %vm133, %vm134
    %vm136 = vmand %vm135, %vm113
    %v137 = vsel %vm136, 1, 0
    %v138 = vcvt.s32.f32 %v137
    %139 = vadd.xlane.f32.xlu0 %v138
    %v140 = vpop.xlane.xlu0 %139
    %v141 = vsel %vm136, %v117, 0.0
    %142 = vadd.xlane.f32.xlu0 %v141
    %v143 = vpop.xlane.xlu0 %142
    %v144 = vmul.f32 %v140, %v123
    %v145 = vsub.f32 %v143, %v144
    %vm146 = vcmask 7168
    %147 = vst.msk [vmem:[%s4] sm:$0xff] %vm146, %v145
    %148 = vst.msk [vmem:[%s5] sm:$0xff] %vm146, %v140
    // Predicated region
    $region22: #{tpu_custom_call.1} parent=1 // pred_check
      _
    $region23: #{tpu_custom_call.1} parent=1 // pred_check_branch
      %150 = sbr.rel (0) target = $region25
    $region24: #{tpu_custom_call.1} parent=1 // pred_region
      _
    $region25: #{tpu_custom_call.1} parent=1 // pred_fallthru
      _
    // Predicated region
    $region26: #{tpu_custom_call.1} parent=1 // pred_check
      _
    $region27: #{tpu_custom_call.1} parent=1 // pred_check_branch
      %152 = sbr.rel (0) target = $region29
    $region28: #{tpu_custom_call.1} parent=1 // pred_region
      _
    $region29: #{tpu_custom_call.1} parent=1 // pred_fallthru
      _
    // Predicated region
    $region30: #{tpu_custom_call.1} parent=1 // pred_check
      _
    $region31: #{tpu_custom_call.1} parent=1 // pred_check_branch
      %154 = sbr.rel (0) target = $region33
    $region32: #{tpu_custom_call.1} parent=1 // pred_region
      _
    $region33: #{tpu_custom_call.1} parent=1 // pred_fallthru
      _
    // Predicated region
    $region34: #{tpu_custom_call.1} parent=1 // pred_check
      _
    $region35: #{tpu_custom_call.1} parent=1 // pred_check_branch
      %156 = sbr.rel (0) target = $region37
    $region36: #{tpu_custom_call.1} parent=1 // pred_region
      _
    $region37: #{tpu_custom_call.1} parent=1 // pred_fallthru
      _
    %157 = vsyncpa [#allocation3], 1

// kernel: tpu_custom_call.1
$region0: #{tpu_custom_call.1}
  #allocation0 [shape = 'u32[]', space=smem, size = 0x4, offset = 0x4, fixed_abs, tag = 'smem constant byte address 0x4 - core index']
  #allocation1 [shape = 'u32[144,128]{1,0:T(1,128)}', space=vmem, size = 0x12000, scoped, tag = 'internal scratch']
  %s0 = inlined_call_operand.vmem [shape: f32[8,32], index: 0, kind: input, shape index: {}]
  %s1 = inlined_call_operand.hbm [shape: bf16[32,128], index: 1, kind: input, shape index: {}]
  %s2 = inlined_call_operand.vmem [shape: s32[8,1], index: 2, kind: input, shape index: {}]
  %s3 = inlined_call_operand.vmem [shape: s32[1,128], index: 3, kind: input, shape index: {}]
  %s4 = inlined_call_operand.vmem [shape: f32[8,1], index: 4, kind: output, shape index: {0}]
  %s5 = inlined_call_operand.vmem [shape: f32[8,1], index: 5, kind: output, shape index: {1}]
  %6 = xla_tuple %s4, %s5
  %s7 = sld [smem:[#allocation0]]
  $region38: #{tpu_custom_call.1} parent=0
    _
  %s9 = ssub.s32 1, %s7
  %s10 = scalar_select 0, %s9, %s7
  $region1: #{tpu_custom_call.1} parent=0
    #allocation2 [shape = 'u8[8192]{0}', space=vmem, size = 0x2000, scoped, tag = 'input window, operand 1, single buffered']
    #allocation3 [shape = 's32[1]{0}', space=sflag, size = 0x4, scoped, tag = 'scoped memory for tpu_custom_call.1']
    %11 = vsyncpa [#allocation3], 0
    // Predicated region
    $region2: #{tpu_custom_call.1} parent=1 // pred_check
      _
    $region3: #{tpu_custom_call.1} parent=1 // pred_check_branch
      %13 = sbr.rel (0) target = $region5
    $region4: #{tpu_custom_call.1} parent=1 // pred_region
      _
    $region5: #{tpu_custom_call.1} parent=1 // pred_fallthru
      _
    // Predicated region
    $region6: #{tpu_custom_call.1} parent=1 // pred_check
      _
    $region7: #{tpu_custom_call.1} parent=1 // pred_check_branch
      %15 = sbr.rel (0) target = $region9
    $region8: #{tpu_custom_call.1} parent=1 // pred_region
      %s17 = ssub.s32 256, 256
      %18 = vsyncadd [#allocation3], %s17
      %s19 = sshll.u32 [#allocation2], 4
      %s20 = int_to_ptr.vmem [resolvable:$true] %s19
      %25 = dma.hbm_to_vmem [thread:$0]  %s1, 256, %s20, [#allocation3], 64, 64, 4
    $region9: #{tpu_custom_call.1} parent=1 // pred_fallthru
      _
    // Predicated region
    $region10: #{tpu_custom_call.1} parent=1 // pred_check
      _
    $region11: #{tpu_custom_call.1} parent=1 // pred_check_branch
      %27 = sbr.rel (0) target = $region13
    $region12: #{tpu_custom_call.1} parent=1 // pred_region
      _
    $region13: #{tpu_custom_call.1} parent=1 // pred_fallthru
      _
    // Predicated region
    $region14: #{tpu_custom_call.1} parent=1 // pred_check
      _
    $region15: #{tpu_custom_call.1} parent=1 // pred_check_branch
      %29 = sbr.rel (0) target = $region17
    $region16: #{tpu_custom_call.1} parent=1 // pred_region
      _
    $region17: #{tpu_custom_call.1} parent=1 // pred_fallthru
      _
    // Predicated region
    $region18: #{tpu_custom_call.1} parent=1 // pred_check
      _
    $region19: #{tpu_custom_call.1} parent=1 // pred_check_branch
      %31 = sbr.rel (0) target = $region21
    $region20: #{tpu_custom_call.1} parent=1 // pred_region
      %32 = dma.done [#allocation3], 256
    $region21: #{tpu_custom_call.1} parent=1 // pred_fallthru
      _
    %v34 = vld [vmem:[%s0] sm:$0xff]
    %v35 = vmul.f32 %v34, %v34
    %vm36 = vcmask 261120
    %v37 = vsel %vm36, %v35, 0.0
    %38 = vadd.xlane.f32.xlu0 %v37
    %v39 = vpop.xlane.xlu0 %38
    %v40 = vmax.f32 %v39, 1e-24
    %v41 = vrsqrt.pop %v40
    %v42 = vmul.f32 %v41, 14.285714
    %v43 = vmul.f32 %v34, %v42
    %v44 = vpack.c.bf16 %v43, %v43
    %v45 = vld [vmem:[#allocation2] sm:$0xf]
    %v46 = vld [vmem:[#allocation2 + $0x4] sm:$0xf]
    %v47 = vld [vmem:[#allocation2 + $0x8] sm:$0xf]
    %v48 = vld [vmem:[#allocation2 + $0xc] sm:$0xf]
    %v53 = vunpack.c.l.b16 %v45
    %v54 = vunpack.c.l.b16 %v46
    %v55 = vunpack.c.l.b16 %v47
    %v56 = vunpack.c.l.b16 %v48
    %v57 = vpack.c.b16 %v54, %v53
    %v58 = vpack.c.b16 %v56, %v55
    %v62 = vsel %vm36, %v44, 0
    %64 = vmatprep.subr.bf16.mxu0 0
    %65 = vmatpush1.bf16.msra.mxu0 %v57
    %66 = vmatprep.subr.bf16.mxu0 0
    %67 = vmatpush1.bf16.msra.mxu0 %v58
    %68 = vmatprep.subr.bf16.mxu0 0
    %69 = vmatpush1.bf16.msra.mxu0 0
    %70 = vmatprep.subr.bf16.mxu0 0
    %71 = vmatpush1.bf16.msra.mxu0 0
    %72 = vmatprep.subr.bf16.mxu0 0
    %73 = vmatpush1.bf16.msra.mxu0 0
    %74 = vmatprep.subr.bf16.mxu0 0
    %75 = vmatpush1.bf16.msra.mxu0 0
    %76 = vmatprep.subr.bf16.mxu0 0
    %77 = vmatpush1.bf16.msra.mxu0 0
    %78 = vmatprep.subr.bf16.mxu0 0
    %79 = vmatpush1.bf16.msra.mxu0 0
    %80 = vmatprep.subr.bf16.mxu0 0
    %81 = vmatpush1.bf16.msra.mxu0 0
    %82 = vmatprep.subr.bf16.mxu0 0
    %83 = vmatpush1.bf16.msra.mxu0 0
    %84 = vmatprep.subr.bf16.mxu0 0
    %85 = vmatpush1.bf16.msra.mxu0 0
    %86 = vmatprep.subr.bf16.mxu0 0
    %87 = vmatpush1.bf16.msra.mxu0 0
    %88 = vmatprep.subr.bf16.mxu0 0
    %89 = vmatpush1.bf16.msra.mxu0 0
    %90 = vmatprep.subr.bf16.mxu0 0
    %91 = vmatpush1.bf16.msra.mxu0 0
    %92 = vmatprep.subr.bf16.mxu0 0
    %93 = vmatpush1.bf16.msra.mxu0 0
    %94 = vmatprep.subr.bf16.mxu0 0
    %95 = vmatpush1.bf16.msra.mxu0 0
    %96 = vmatprep.mubr.bf16.mxu0 0
    %97 = vmatmul.mubr.bf16.gmra.mrb[0].mxu0 %v62
    %v98 = vpop.f32.mrb[0].mxu0
    %v99 = vadd.f32 0.0, %v98
    %v100 = vpop.f32.mrb[0].mxu0
    %v101 = vpop.f32.mrb[0].mxu0
    %v102 = vpop.f32.mrb[0].mxu0
    %103 = vdwg.mxu0
    %s104 = smul.u32 0, 8
    %v105 = vlaneseq
    %v106 = vshrl.u32 %v105, 7
    %v107 = vstv %s104
    %v108 = vadd.s32 %v107, %v106
    %v109 = vlaneseq
    %v110 = vand.u32 %v109, 127
    %vm111 = vcmp.lt.s32.totalorder %v110, 8
    %v112 = vsel %vm111, 1, 0
    %vm113 = vcmp.eq.s32.totalorder %v112, 1
    %v114 = vsel %vm113, %v99, -1e+30
    %115 = vmax.xlane.f32.xlu0 %v114
    %v116 = vpop.xlane.xlu0 %115
    %v117 = vsub.f32 %v114, %v116
    %v118 = vmul.f32 %v117, 1.442695
    %v119 = vpow.pop %v118
    %120 = vadd.xlane.f32.xlu0 %v119
    %v121 = vpop.xlane.xlu0 %120
    %v122 = vlog2.pop %v121
    %v123 = vmul.f32 %v122, 0.6931472
    %v124 = vld [vmem:[%s2] sm:$0xff]
    %v125 = vld [vmem:[%s3] sm:$0x1]
    %126 = vset.pattern.permute.xlu0 0
    %127 = vperm.xlu0 %126, %v124
    %v128 = vpop.permute.xlu0 %127
    %v129 = vlaneseq
    %v130 = vshrl.u32 %v129, 7
    %v131 = vsub.s32 0, %v130
    %v132 = vrot.slane %v125, %v131
    %vm133 = vcmp.eq.s32.totalorder %v128, %v132
    %vm134 = vcmp.ne.s32.totalorder %v108, %v110
    %vm135 = vmand %vm133, %vm134
    %vm136 = vmand %vm135, %vm113
    %v137 = vsel %vm136, 1, 0
    %v138 = vcvt.s32.f32 %v137
    %139 = vadd.xlane.f32.xlu0 %v138
    %v140 = vpop.xlane.xlu0 %139
    %v141 = vsel %vm136, %v117, 0.0
    %142 = vadd.xlane.f32.xlu0 %v141
    %v143 = vpop.xlane.xlu0 %142
    %v144 = vmul.f32 %v140, %v123
    %v145 = vsub.f32 %v143, %v144
    %vm146 = vcmask 7168
    %147 = vst.msk [vmem:[%s4] sm:$0xff] %vm146, %v145
    %148 = vst.msk [vmem:[%s5] sm:$0xff] %vm146, %v140
    // Predicated region
    $region22: #{tpu_custom_call.1} parent=1 // pred_check
      _
    $region23: #{tpu_custom_call.1} parent=1 // pred_check_branch
      %150 = sbr.rel (0) target = $region25
    $region24: #{tpu_custom_call.1} parent=1 // pred_region
      _
    $region25: #{tpu_custom_call.1} parent=1 // pred_fallthru
      _
    // Predicated region
    $region26: #{tpu_custom_call.1} parent=1 // pred_check
      _
    $region27: #{tpu_custom_call.1} parent=1 // pred_check_branch
      %152 = sbr.rel (0) target = $region29
    $region28: #{tpu_custom_call.1} parent=1 // pred_region
      _
    $region29: #{tpu_custom_call.1} parent=1 // pred_fallthru
      _
    // Predicated region
    $region30: #{tpu_custom_call.1} parent=1 // pred_check
      _
    $region31: #{tpu_custom_call.1} parent=1 // pred_check_branch
      %154 = sbr.rel (0) target = $region33
    $region32: #{tpu_custom_call.1} parent=1 // pred_region
      _
    $region33: #{tpu_custom_call.1} parent=1 // pred_fallthru
      _
    // Predicated region
    $region34: #{tpu_custom_call.1} parent=1 // pred_check
      _
    $region35: #{tpu_custom_call.1} parent=1 // pred_check_branch
      %156 = sbr.rel (0) target = $region37
    $region36: #{tpu_custom_call.1} parent=1 // pred_region
      _
    $region37: #{tpu_custom_call.1} parent=1 // pred_fallthru
      _
    %157 = vsyncpa [#allocation3], 1

</llo_original>
